<compile_context>
chip_gen: v7x
topology: tpu7x:2x2x1
jax: 0.10.0
libtpu: 0.0.40
codegen_flags: <defaults>
</compile_context>

<pallas_src>
import functools

import jax
import jax.numpy as jnp
from jax.experimental import pallas as pl
from jax.experimental.pallas import tpu as pltpu

_LANES = 128
_SUBLANES = 8


def _round_up(x, m):
    return ((x + m - 1) // m) * m


def _cdiv(a, b):
    return -(-a // b)


def _int_pow(v, n):
    """v**n for static int n >= 1 via square-and-multiply (VPU mults only)."""
    result = None
    base = v
    while n:
        if n & 1:
            result = base if result is None else result * base
        n >>= 1
        if n:
            base = base * base
    return result


def _focal_elementwise(x, t, gamma, alpha):
    """Stable BCE-with-logits + focal weighting in f32 (VPU/EUP only)."""
    # bce = max(x,0) - x*t + log1p(exp(-|x|))
    # (matches F.binary_cross_entropy_with_logits, reduction='none')
    bce = jnp.maximum(x, 0.0) - x * t + jnp.log1p(jnp.exp(-jnp.abs(x)))
    pt = jnp.exp(-bce)
    one_minus_pt = 1.0 - pt
    g = float(gamma)
    if g == int(g) and 0 <= int(g) <= 16:
        gi = int(g)
        if gi == 0:
            w = jnp.ones_like(one_minus_pt)
        else:
            # Integer gamma: multiply chain, no exp/log pow lowering.
            w = _int_pow(one_minus_pt, gi)
    else:
        w = one_minus_pt ** jnp.float32(g)
    return alpha * w * bce


def _mask_tail(focal, row0, n_total):
    """Zero out flat indices >= n_total (padding)."""
    rows, lanes = focal.shape
    ridx = jax.lax.broadcasted_iota(jnp.int32, (rows, lanes), 0)
    cidx = jax.lax.broadcasted_iota(jnp.int32, (rows, lanes), 1)
    gidx = (row0 + ridx) * lanes + cidx
    return jnp.where(gidx < n_total, focal, 0.0)


def _focal_single_kernel(x_ref, t_ref, o_ref, *, gamma, alpha, n_total, masked):
    """Whole problem in one block: compute, reduce once, write SMEM scalar."""
    x = x_ref[...].astype(jnp.float32)
    t = t_ref[...].astype(jnp.float32)
    focal = _focal_elementwise(x, t, gamma, alpha)
    if masked:
        focal = _mask_tail(focal, 0, n_total)
    o_ref[0, 0] = jnp.sum(focal) / jnp.float32(n_total)


def _focal_tiled_kernel(x_ref, t_ref, o_ref, acc_ref, *, gamma, alpha,
                        n_total, masked, inner, tile):
    """Streaming path: (tile,128) blocks folded into an (8,128) accumulator.

    Grid is (n_split, inner); the outer axis is "parallel" (one partial-sum
    output block per TensorCore on megacore chips), the inner axis streams the
    core's row range.
    """
    c = pl.program_id(0)
    i = pl.program_id(1)

    @pl.when(i == 0)
    def _():
        acc_ref[...] = jnp.zeros_like(acc_ref)

    x = x_ref[...].astype(jnp.float32)
    t = t_ref[...].astype(jnp.float32)
    focal = _focal_elementwise(x, t, gamma, alpha)
    if masked:
        focal = _mask_tail(focal, (c * inner + i) * tile, n_total)

    # Per-step: pure VPU adds into the (8,128) vector accumulator; no per-step
    # cross-lane (XLU) reduction.  The reshape splits the sublane-major dim on
    # a vreg-tile boundary, so it is a free view.
    acc_ref[...] += jnp.sum(
        focal.reshape(tile // _SUBLANES, _SUBLANES, _LANES), axis=0)

    @pl.when(i == inner - 1)
    def _():
        o_ref[...] = acc_ref[...]


def focal_loss(inputs, targets, gamma=2, alpha=0.25, *,
               row_tile=1024, single_shot_max_rows=2048, core_split=2):
    """Drop-in equivalent of FocalLoss(gamma, alpha)(inputs, targets) -> scalar."""
    assert inputs.shape == targets.shape
    n_total = inputs.size
    assert n_total > 0

    x = inputs.reshape(-1)
    t = targets.reshape(-1)
    rows = _cdiv(n_total, _LANES)

    if rows <= single_shot_max_rows:
        # ---- single-shot: one block, no grid, no accumulator ----
        rows_p = _round_up(rows, _SUBLANES)
        n_padded = rows_p * _LANES
        masked = n_padded != n_total
        if masked:
            x = jnp.pad(x, (0, n_padded - n_total))
            t = jnp.pad(t, (0, n_padded - n_total))
        x2 = x.reshape(rows_p, _LANES)
        t2 = t.reshape(rows_p, _LANES)

        kernel = functools.partial(_focal_single_kernel, gamma=gamma,
                                   alpha=alpha, n_total=n_total, masked=masked)
        out = pl.pallas_call(
            kernel,
            out_shape=jax.ShapeDtypeStruct((1, 1), jnp.float32),
            in_specs=[
                pl.BlockSpec((rows_p, _LANES), lambda: (0, 0)),
                pl.BlockSpec((rows_p, _LANES), lambda: (0, 0)),
            ],
            out_specs=pl.BlockSpec(memory_space=pltpu.SMEM),
        )(x2, t2)
        return out[0, 0]

    # ---- tiled: stream (tile, 128) blocks, 2-way core split on megacore ----
    n_split = max(1, int(core_split))
    # Cap the tile so each core's subgrid has >= 2 steps (DMA/compute overlap).
    tile = max(_SUBLANES,
               _round_up(min(row_tile, _cdiv(rows, 2 * n_split)), _SUBLANES))
    rows_p = _round_up(rows, tile * n_split)
    inner = rows_p // (tile * n_split)
    n_padded = rows_p * _LANES
    masked = n_padded != n_total
    if masked:
        x = jnp.pad(x, (0, n_padded - n_total))
        t = jnp.pad(t, (0, n_padded - n_total))
    x2 = x.reshape(rows_p, _LANES)
    t2 = t.reshape(rows_p, _LANES)

    kernel = functools.partial(_focal_tiled_kernel, gamma=gamma, alpha=alpha,
                               n_total=n_total, masked=masked, inner=inner,
                               tile=tile)
    block_map = lambda c, i: (c * inner + i, 0)
    partials = pl.pallas_call(
        kernel,
        out_shape=jax.ShapeDtypeStruct((n_split * _SUBLANES, _LANES),
                                       jnp.float32),
        grid_spec=pltpu.PrefetchScalarGridSpec(
            num_scalar_prefetch=0,
            grid=(n_split, inner),
            in_specs=[
                pl.BlockSpec((tile, _LANES), block_map),
                pl.BlockSpec((tile, _LANES), block_map),
            ],
            out_specs=pl.BlockSpec((_SUBLANES, _LANES), lambda c, i: (c, 0)),
            scratch_shapes=[pltpu.VMEM((_SUBLANES, _LANES), jnp.float32)],
        ),
        compiler_params=pltpu.CompilerParams(
            dimension_semantics=("parallel", "arbitrary"),
        ),
    )(x2, t2)
    # Tiny finishing reduce of the per-core (8,128) partials + mean division.
    return jnp.sum(partials) / jnp.float32(n_total)


def focal_loss_ref(inputs, targets, gamma=2, alpha=0.25):
    """Pure-JAX reference mirroring the PyTorch module."""
    x = inputs.astype(jnp.float32)
    t = targets.astype(jnp.float32)
    bce = jnp.maximum(x, 0.0) - x * t + jnp.log1p(jnp.exp(-jnp.abs(x)))
    pt = jnp.exp(-bce)
    return jnp.mean(alpha * ((1.0 - pt) ** gamma) * bce)


if __name__ == "__main__":
    key = jax.random.PRNGKey(0)
    k1, k2, k3, k4, k5, k6 = jax.random.split(key, 6)

    # 1) Shipped NCHW example -> single-shot path (16x128 block, no padding).
    x_a = jax.random.normal(k1, (2, 4, 16, 16), dtype=jnp.float32)
    t_a = (jax.random.uniform(k2, (2, 4, 16, 16)) > 0.5).astype(jnp.float32)
    out_a = jax.block_until_ready(focal_loss(x_a, t_a, gamma=2, alpha=0.25))
    ref_a = focal_loss_ref(x_a, t_a, gamma=2, alpha=0.25)
    assert jnp.allclose(out_a, ref_a, rtol=1e-5, atol=1e-6), (out_a, ref_a)

    # 2) Same inputs, non-integer gamma -> float-pow fallback path.
    out_b = jax.block_until_ready(focal_loss(x_a, t_a, gamma=1.5, alpha=0.25))
    ref_b = focal_loss_ref(x_a, t_a, gamma=1.5, alpha=0.25)
    assert jnp.allclose(out_b, ref_b, rtol=1e-5, atol=1e-6), (out_b, ref_b)

    # 3) Ragged shape (padding + in-kernel mask), forced through the tiled
    #    path with the 2-way core split and a tiny tile.
    x_c = jax.random.normal(k3, (2, 3, 50, 33), dtype=jnp.float32)
    t_c = (jax.random.uniform(k4, (2, 3, 50, 33)) > 0.5).astype(jnp.float32)
    out_c = jax.block_until_ready(
        focal_loss(x_c, t_c, gamma=2, alpha=0.25,
                   row_tile=32, single_shot_max_rows=0))
    ref_c = focal_loss_ref(x_c, t_c, gamma=2, alpha=0.25)
    assert jnp.allclose(out_c, ref_c, rtol=1e-4, atol=1e-6), (out_c, ref_c)

    # 4) Larger input -> tiled path, (2, inner) grid, vector accumulator.
    x_d = jax.random.normal(k5, (8, 8, 64, 128), dtype=jnp.float32)
    t_d = (jax.random.uniform(k6, (8, 8, 64, 128)) > 0.5).astype(jnp.float32)
    out_d = jax.block_until_ready(focal_loss(x_d, t_d, gamma=2, alpha=0.25))
    ref_d = focal_loss_ref(x_d, t_d, gamma=2, alpha=0.25)
    assert jnp.allclose(out_d, ref_d, rtol=1e-4, atol=1e-6), (out_d, ref_d)

    print("KERNEL_OK")
</pallas_src>

<mosaic_0001>
module attributes {stable_mosaic.version = 11 : i64} {
  func.func @_focal_single_kernel(%arg0: memref<16x128xf32, #tpu.memory_space<vmem>>, %arg1: memref<16x128xf32, #tpu.memory_space<vmem>>, %arg2: memref<1x1xf32, #tpu.memory_space<smem>>) attributes {dimension_semantics = [], scalar_prefetch = 0 : i64, scratch_operands = 0 : i64, tpu.core_type = #tpu.core_type<tc>} {
    %c0 = arith.constant 0 : index
    %c0_0 = arith.constant 0 : index
    %0 = vector.load %arg0[%c0, %c0_0] : memref<16x128xf32, #tpu.memory_space<vmem>>, vector<16x128xf32>
    %c0_1 = arith.constant 0 : index
    %c0_2 = arith.constant 0 : index
    %1 = vector.load %arg1[%c0_1, %c0_2] : memref<16x128xf32, #tpu.memory_space<vmem>>, vector<16x128xf32>
    %cst = arith.constant 0.000000e+00 : f32
    %2 = vector.broadcast %cst : f32 to vector<16x128xf32>
    %3 = arith.maximumf %0, %2 : vector<16x128xf32>
    %4 = arith.mulf %0, %1 : vector<16x128xf32>
    %5 = arith.subf %3, %4 : vector<16x128xf32>
    %6 = math.absf %0 : vector<16x128xf32>
    %cst_3 = arith.constant 0.000000e+00 : f32
    %7 = vector.broadcast %cst_3 : f32 to vector<16x128xf32>
    %8 = arith.subf %7, %6 : vector<16x128xf32>
    %9 = math.exp %8 : vector<16x128xf32>
    %10 = math.log1p %9 : vector<16x128xf32>
    %11 = arith.addf %5, %10 : vector<16x128xf32>
    %cst_4 = arith.constant 0.000000e+00 : f32
    %12 = vector.broadcast %cst_4 : f32 to vector<16x128xf32>
    %13 = arith.subf %12, %11 : vector<16x128xf32>
    %14 = math.exp %13 : vector<16x128xf32>
    %cst_5 = arith.constant 1.000000e+00 : f32
    %15 = vector.broadcast %cst_5 : f32 to vector<16x128xf32>
    %16 = arith.subf %15, %14 : vector<16x128xf32>
    %17 = arith.mulf %16, %16 : vector<16x128xf32>
    %cst_6 = arith.constant 2.500000e-01 : f32
    %18 = vector.broadcast %cst_6 : f32 to vector<16x128xf32>
    %19 = arith.mulf %18, %17 : vector<16x128xf32>
    %20 = arith.mulf %19, %11 : vector<16x128xf32>
    %21 = vector.shape_cast %20 : vector<16x128xf32> to vector<1x16x128xf32>
    %cst_7 = arith.constant dense<0.000000e+00> : vector<1xf32>
    %22 = vector.multi_reduction <add>, %21, %cst_7 [1, 2] : vector<1x16x128xf32> to vector<1xf32>
    %23 = vector.shape_cast %22 : vector<1xf32> to vector<1x1x1xf32>
    %24 = vector.extract %23[0, 0, 0] : f32 from vector<1x1x1xf32>
    %cst_8 = arith.constant 2.048000e+03 : f32
    %25 = arith.divf %24, %cst_8 : f32
    %c0_9 = arith.constant 0 : index
    %c0_10 = arith.constant 0 : index
    %26 = memref.load %arg2[%c0_9, %c0_10] : memref<1x1xf32, #tpu.memory_space<smem>>
    memref.store %25, %arg2[%c0_9, %c0_10] : memref<1x1xf32, #tpu.memory_space<smem>>
    return
  }
}

</mosaic_0001>

<llo_original>
// kernel: tpu_custom_call.1
$region0: #{tpu_custom_call.1}
  #allocation0 [shape = 'u32[]', space=smem, size = 0x4, offset = 0x4, fixed_abs, tag = 'smem constant byte address 0x4 - core index']
  #allocation1 [shape = 'u32[144,128]{1,0:T(1,128)}', space=vmem, size = 0x12000, scoped, tag = 'internal scratch']
  %s0 = inlined_call_operand.hbm [shape: f32[16,128], index: 0, kind: input, shape index: {}]
  %s1 = inlined_call_operand.hbm [shape: f32[16,128], index: 1, kind: input, shape index: {}]
  %s2 = inlined_call_operand.hbm [shape: f32[1,1], index: 2, kind: output, shape index: {}]
  %s3 = sld [smem:[#allocation0]]
  $region26: #{tpu_custom_call.1} parent=0
    _
  %s5 = ssub.s32 1, %s3
  %s6 = scalar_select 0, %s5, %s3
  $region1: #{tpu_custom_call.1} parent=0
    #allocation2 [shape = 'u8[8192]{0}', space=vmem, size = 0x2000, scoped, tag = 'input window, operand 0, single buffered']
    #allocation3 [shape = 's32[1]{0}', space=sflag, size = 0x4, scoped, tag = 'scoped memory for tpu_custom_call.1']
    #allocation4 [shape = 's32[1]{0}', space=sflag, size = 0x4, scoped, tag = 'scoped memory for tpu_custom_call.1']
    #allocation5 [shape = 'u8[8192]{0}', space=vmem, size = 0x2000, scoped, tag = 'input window, operand 1, single buffered']
    #allocation6 [shape = 's32[1]{0}', space=sflag, size = 0x4, scoped, tag = 'scoped memory for tpu_custom_call.1']
    #allocation7 [shape = 'u8[512]{0}', space=smem, size = 0x200, scoped, tag = 'output window, operand 0, single buffered']
    %7 = vsyncpa [#allocation3], 0
    %8 = vsyncpa [#allocation6], 0
    %9 = vsyncpa [#allocation4], 0
    // Predicated region
    $region2: #{tpu_custom_call.1} parent=1 // pred_check
      _
    $region3: #{tpu_custom_call.1} parent=1 // pred_check_branch
      %11 = sbr.rel (0) target = $region5
    $region4: #{tpu_custom_call.1} parent=1 // pred_region
      %s13 = ssub.s32 256, 256
      %14 = vsyncadd [#allocation3], %s13
      %s15 = sshll.u32 [#allocation2], 4
      %s16 = int_to_ptr.vmem [resolvable:$true] %s15
      %21 = dma.hbm_to_vmem [thread:$0]  %s0, 256, %s16, [#allocation3], 128, 128, 8
    $region5: #{tpu_custom_call.1} parent=1 // pred_fallthru
      _
    // Predicated region
    $region6: #{tpu_custom_call.1} parent=1 // pred_check
      _
    $region7: #{tpu_custom_call.1} parent=1 // pred_check_branch
      %23 = sbr.rel (0) target = $region9
    $region8: #{tpu_custom_call.1} parent=1 // pred_region
      %s25 = ssub.s32 256, 256
      %26 = vsyncadd [#allocation6], %s25
      %s27 = sshll.u32 [#allocation5], 4
      %s28 = int_to_ptr.vmem [resolvable:$true] %s27
      %33 = dma.hbm_to_vmem [thread:$0]  %s1, 256, %s28, [#allocation6], 128, 128, 8
    $region9: #{tpu_custom_call.1} parent=1 // pred_fallthru
      _
    // Predicated region
    $region10: #{tpu_custom_call.1} parent=1 // pred_check
      _
    $region11: #{tpu_custom_call.1} parent=1 // pred_check_branch
      %35 = sbr.rel (0) target = $region13
    $region12: #{tpu_custom_call.1} parent=1 // pred_region
      %36 = dma.done [#allocation3], 256
    $region13: #{tpu_custom_call.1} parent=1 // pred_fallthru
      _
    // Predicated region
    $region14: #{tpu_custom_call.1} parent=1 // pred_check
      _
    $region15: #{tpu_custom_call.1} parent=1 // pred_check_branch
      %38 = sbr.rel (0) target = $region17
    $region16: #{tpu_custom_call.1} parent=1 // pred_region
      %39 = dma.done [#allocation6], 256
    $region17: #{tpu_custom_call.1} parent=1 // pred_fallthru
      _
    %v40 = vld [vmem:[#allocation2] sm:$0xff]
    %v41 = vld [vmem:[#allocation2 + $0x8] sm:$0xff]
    %v42 = vld [vmem:[#allocation5] sm:$0xff]
    %v43 = vld [vmem:[#allocation5 + $0x8] sm:$0xff]
    %v44 = vmax.f32 %v40, 0.0
    %v45 = vmax.f32 %v41, 0.0
    %v46 = vmul.f32 %v40, %v42
    %v47 = vmul.f32 %v41, %v43
    %v48 = vsub.f32 %v44, %v46
    %v49 = vsub.f32 %v45, %v47
    %v50 = vand.u32 2147483647, %v40
    %v51 = vand.u32 2147483647, %v41
    %v52 = vsub.f32 0.0, %v50
    %v53 = vsub.f32 0.0, %v51
    %v54 = vmul.f32 %v52, 1.442695
    %v55 = vpow.pop %v54
    %v56 = vmul.f32 %v53, 1.442695
    %v57 = vpow.pop %v56
    %v58 = vadd.f32 %v55, 1.0
    %v59 = vlog2.pop %v58
    %v60 = vmul.f32 %v59, 0.6931472
    %v61 = vmul.f32 -0.5, %v55
    %v62 = vadd.f32 %v61, 1.0
    %v63 = vmul.f32 %v62, %v55
    %v64 = vand.u32 2147483647, %v55
    %vm65 = vcmp.lt.f32.partialorder %v64, 0.0004427343
    %v66 = vsel %vm65, %v63, %v60
    %v67 = vadd.f32 %v57, 1.0
    %v68 = vlog2.pop %v67
    %v69 = vmul.f32 %v68, 0.6931472
    %v70 = vmul.f32 -0.5, %v57
    %v71 = vadd.f32 %v70, 1.0
    %v72 = vmul.f32 %v71, %v57
    %v73 = vand.u32 2147483647, %v57
    %vm74 = vcmp.lt.f32.partialorder %v73, 0.0004427343
    %v75 = vsel %vm74, %v72, %v69
    %v76 = vadd.f32 %v48, %v66
    %v77 = vadd.f32 %v49, %v75
    %v78 = vsub.f32 0.0, %v76
    %v79 = vsub.f32 0.0, %v77
    %v80 = vmul.f32 %v78, 1.442695
    %v81 = vpow.pop %v80
    %v82 = vmul.f32 %v79, 1.442695
    %v83 = vpow.pop %v82
    %v84 = vsub.f32 1.0, %v81
    %v85 = vsub.f32 1.0, %v83
    %v86 = vmul.f32 %v84, %v84
    %v87 = vmul.f32 %v85, %v85
    %v88 = vmul.f32 %v86, 0.25
    %v89 = vmul.f32 %v87, 0.25
    %v90 = vmul.f32 %v88, %v76
    %v91 = vmul.f32 %v89, %v77
    %v92 = vadd.f32 %v90, %v91
    %93 = vadd.xlane.f32.xlu0 %v92
    %v94 = vpop.xlane.xlu0 %93
    %v95 = vrot.slane %v94, 4
    %v96 = vadd.f32 %v94, %v95
    %v97 = vrot.slane %v96, 2
    %v98 = vadd.f32 %v96, %v97
    %v99 = vrot.slane %v98, 1
    %v100 = vadd.f32 %v98, %v99
    %s101 = vtos %v100
    %v102 = vrcp.pop 2048.0
    %s103 = vtos %v102
    %s104 = smul.f32 %s101, %s103
    %s105 = scalar_lea.smem [#allocation7], 0
    %106 = sst [smem:[%s105]] %s104
    // Predicated region
    $region18: #{tpu_custom_call.1} parent=1 // pred_check
      _
    $region19: #{tpu_custom_call.1} parent=1 // pred_check_branch
      %108 = sbr.rel (0) target = $region21
    $region20: #{tpu_custom_call.1} parent=1 // pred_region
      %s110 = ssub.s32 16, 16
      %111 = vsyncadd [#allocation4], %s110
      %114 = dma.smem_to_hbm [#allocation7], 16, %s2, [#allocation4]
    $region21: #{tpu_custom_call.1} parent=1 // pred_fallthru
      _
    // Predicated region
    $region22: #{tpu_custom_call.1} parent=1 // pred_check
      _
    $region23: #{tpu_custom_call.1} parent=1 // pred_check_branch
      %116 = sbr.rel (0) target = $region25
    $region24: #{tpu_custom_call.1} parent=1 // pred_region
      %117 = dma.done [#allocation4], 16
    $region25: #{tpu_custom_call.1} parent=1 // pred_fallthru
      _
    %118 = sfence
    %119 = vsyncpa [#allocation3], 1
    %120 = vsyncpa [#allocation6], 1
    %121 = vsyncpa [#allocation4], 1

</llo_original>
